<compile_context>
chip_gen: v6e
topology: v6e:2x2x1
jax: 0.10.0
libtpu: 0.0.40
codegen_flags: <defaults>
</compile_context>

<pallas_src>
import functools

import jax
import jax.numpy as jnp
from jax.experimental import pallas as pl
from jax.experimental.pallas import tpu as pltpu

# ----------------------------- configuration -------------------------------
BATCH_NORM = True     # matches SparseConvolutionDownsample(batch_norm=True, ...)
LEAKY_RELU = True     # matches SparseConvolutionDownsample(..., leaky_relu=True)
LEAKINESS = 0.333     # scn default leakiness for LeakyReLU
BN_EPS = 1e-4         # scn BatchNormalization default eps


# ------------------------------ Pallas kernel ------------------------------
def _downsample_kernel(pt_ref, wt_ref, mask_ref, scale_ref, shift_ref, o_ref, *,
                       leak):
    # pt_ref:    (K, tm)    bf16   transposed patches, M on the lane axis
    # wt_ref:    (Cout, K)  bf16   transposed weights (resident across the grid)
    # mask_ref:  (1, tm)    f32    output-site active mask
    # scale_ref: (Cout, 1)  f32    folded BatchNorm scale
    # shift_ref: (Cout, 1)  f32    folded BatchNorm shift
    # o_ref:     (Cout, tm) f32    lane-dense output tile
    acc = jnp.dot(wt_ref[...], pt_ref[...],
                  preferred_element_type=jnp.float32)          # MXU, f32 acc
    y = acc * scale_ref[...] + shift_ref[...]                  # BN affine (VPU)
    y = jnp.where(y > 0, y, leak * y)                          # (Leaky)ReLU
    o_ref[...] = (y * mask_ref[...]).astype(o_ref.dtype)       # only active sites


def _fused_conv_bn_relu(patches_t, w_t, mask_row, scale_col, shift_col, leak,
                        tm_target=512):
    # patches_t: (K, M) bf16;  w_t: (Cout, K) bf16;  mask_row: (1, M) f32
    K, M = patches_t.shape
    Cout = w_t.shape[0]

    # Tile size: multiple of 128 lanes, large for HBM-roofline efficiency.
    tm = min(tm_target, ((M + 127) // 128) * 128)
    M_pad = ((M + tm - 1) // tm) * tm
    if M_pad != M:
        # Ragged tail only; no-op for the example shapes.
        patches_t = jnp.pad(patches_t, ((0, 0), (0, M_pad - M)))
        mask_row = jnp.pad(mask_row, ((0, 0), (0, M_pad - M)))

    cost = pl.CostEstimate(
        flops=2 * M_pad * K * Cout,
        transcendentals=0,
        bytes_accessed=(patches_t.size * 2 + w_t.size * 2
                        + mask_row.size * 4 + (Cout + Cout) * 4
                        + M_pad * Cout * 4),
    )

    out_t = pl.pallas_call(
        functools.partial(_downsample_kernel, leak=leak),
        out_shape=jax.ShapeDtypeStruct((Cout, M_pad), jnp.float32),
        grid=(M_pad // tm,),
        in_specs=[
            pl.BlockSpec((K, tm), lambda i: (0, i)),       # patches (streamed)
            pl.BlockSpec((Cout, K), lambda i: (0, 0)),     # weights (resident)
            pl.BlockSpec((1, tm), lambda i: (0, i)),       # output mask
            pl.BlockSpec((Cout, 1), lambda i: (0, 0)),     # bn scale
            pl.BlockSpec((Cout, 1), lambda i: (0, 0)),     # bn shift
        ],
        out_specs=pl.BlockSpec((Cout, tm), lambda i: (0, i)),
        compiler_params=pltpu.CompilerParams(
            dimension_semantics=("parallel",),             # megacore splits M
            vmem_limit_bytes=32 * 1024 * 1024),            # fits v5e/v6e/v7x
        cost_estimate=cost,
    )(patches_t, w_t, mask_row, scale_col, shift_col)
    return out_t[:, :M]


# ------------------------------- glue (JAX) --------------------------------
def _space_to_depth_T(x_ndhwc):
    # [N, D, H, W, C] -> [8*C, N*(D/2)*(H/2)*(W/2)]
    # rows: offset-major (dz, dy, dx) then channel; cols: (n, d2, h2, w2)
    N, D, H, W, C = x_ndhwc.shape
    xr = x_ndhwc.reshape(N, D // 2, 2, H // 2, 2, W // 2, 2, C)
    xt = jnp.transpose(xr, (2, 4, 6, 7, 0, 1, 3, 5))     # [2,2,2,C, N,D2,H2,W2]
    return xt.reshape(8 * C, N * (D // 2) * (H // 2) * (W // 2))


def _downsample_mask(mask_ndhw):
    # output active iff any input in the 2x2x2 block is active
    N, D, H, W = mask_ndhw.shape
    m = mask_ndhw.reshape(N, D // 2, 2, H // 2, 2, W // 2, 2)
    return m.max(axis=(2, 4, 6))                          # [N, D2, H2, W2]


def sparse_downsample_forward(x_ncdhw, mask_ndhw, weight_8_cin_cout,
                              bn_gamma, bn_beta, bn_mean, bn_var):
    """Forward pass of SparseConvolutionDownsample on the dense representation."""
    N, Cin, D, H, W = x_ncdhw.shape
    Cout = weight_8_cin_cout.shape[-1]
    D2, H2, W2 = D // 2, H // 2, W // 2

    # sparse-tensor invariant: inactive sites hold zero features
    x_ndhwc = jnp.transpose(x_ncdhw, (0, 2, 3, 4, 1)) * mask_ndhw[..., None]

    # one fused transpose+cast pass: no inflated im2col matrix in HBM
    patches_t = _space_to_depth_T(x_ndhwc).astype(jnp.bfloat16)   # [8*Cin, M]
    w_t = weight_8_cin_cout.reshape(8 * Cin, Cout).T.astype(jnp.bfloat16)

    out_mask = _downsample_mask(mask_ndhw)                        # [N,D2,H2,W2]
    mask_row = out_mask.reshape(1, -1).astype(jnp.float32)

    if BATCH_NORM:
        scale = bn_gamma / jnp.sqrt(bn_var + BN_EPS)              # inference BN
        shift = bn_beta - bn_mean * scale
    else:
        scale = jnp.ones((Cout,), jnp.float32)
        shift = jnp.zeros((Cout,), jnp.float32)
    leak = LEAKINESS if LEAKY_RELU else 0.0

    out_t = _fused_conv_bn_relu(
        patches_t, w_t, mask_row,
        scale.reshape(Cout, 1).astype(jnp.float32),
        shift.reshape(Cout, 1).astype(jnp.float32),
        leak)                                                     # [Cout, M]

    out = out_t.reshape(Cout, N, D2, H2, W2)
    return jnp.transpose(out, (1, 0, 2, 3, 4))                    # NCDHW

# TODO(synk): a true submanifold-style formulation would gather only the ~30%
# active output rows (PrefetchScalarGridSpec row gather) and scatter back;
# kept dense+masked here for static shapes.
# TODO(synk): scn BatchNorm in training mode uses batch statistics over active
# sites; here BN is folded to inference-mode affine parameters.


# ------------------------------ reference (JAX) -----------------------------
def sparse_downsample_reference(x_ncdhw, mask_ndhw, weight, g, b, m, v):
    N, Cin, D, H, W = x_ncdhw.shape
    Cout = weight.shape[-1]
    D2, H2, W2 = D // 2, H // 2, W // 2
    x_ndhwc = jnp.transpose(x_ncdhw, (0, 2, 3, 4, 1)) * mask_ndhw[..., None]
    xr = x_ndhwc.reshape(N, D2, 2, H2, 2, W2, 2, Cin)
    patches = jnp.transpose(xr, (0, 1, 3, 5, 2, 4, 6, 7)).reshape(-1, 8 * Cin)
    y = patches @ weight.reshape(8 * Cin, Cout)
    if BATCH_NORM:
        scale = g / jnp.sqrt(v + BN_EPS)
        y = y * scale + (b - m * scale)
    leak = LEAKINESS if LEAKY_RELU else 0.0
    y = jnp.where(y > 0, y, leak * y)
    out_mask = _downsample_mask(mask_ndhw).reshape(-1, 1)
    y = y * out_mask
    return jnp.transpose(y.reshape(N, D2, H2, W2, Cout), (0, 4, 1, 2, 3))


# ---------------------------------- main ------------------------------------
if __name__ == "__main__":
    N, Cin, Cout = 2, 4, 8
    D = H = W = 16

    key = jax.random.PRNGKey(0)
    kx, km, kw, kg, kb, kmu, kvar = jax.random.split(key, 7)

    x = jax.random.normal(kx, (N, Cin, D, H, W), dtype=jnp.float32)
    mask = (jax.random.uniform(km, (N, D, H, W)) < 0.3).astype(jnp.float32)

    # scn.Convolution weight: (filter_volume=8, nIn, nOut), no bias
    w_std = (2.0 / (8 * Cin)) ** 0.5
    weight = w_std * jax.random.normal(kw, (8, Cin, Cout), dtype=jnp.float32)

    # BatchNorm parameters (inference-mode affine)
    bn_gamma = 1.0 + 0.1 * jax.random.normal(kg, (Cout,), dtype=jnp.float32)
    bn_beta = 0.1 * jax.random.normal(kb, (Cout,), dtype=jnp.float32)
    bn_mean = 0.1 * jax.random.normal(kmu, (Cout,), dtype=jnp.float32)
    bn_var = jnp.abs(1.0 + 0.1 * jax.random.normal(kvar, (Cout,), dtype=jnp.float32))

    out = sparse_downsample_forward(x, mask, weight, bn_gamma, bn_beta,
                                    bn_mean, bn_var)
    out = jax.block_until_ready(out)

    ref = sparse_downsample_reference(x, mask, weight, bn_gamma, bn_beta,
                                      bn_mean, bn_var)
    assert out.shape == (N, Cout, D // 2, H // 2, W // 2)
    # bf16 matmul operands vs f32 reference -> loosened tolerance
    assert jnp.allclose(out, ref, atol=5e-2, rtol=5e-2)

    print("KERNEL_OK")
</pallas_src>

<mosaic_0001>
module attributes {stable_mosaic.version = 11 : i64} {
  func.func @_downsample_kernel(%arg0: i32, %arg1: memref<32x512xbf16, #tpu.memory_space<vmem>>, %arg2: memref<8x32xbf16, #tpu.memory_space<vmem>>, %arg3: memref<1x512xf32, #tpu.memory_space<vmem>>, %arg4: memref<8x1xf32, #tpu.memory_space<vmem>>, %arg5: memref<8x1xf32, #tpu.memory_space<vmem>>, %arg6: memref<8x512xf32, #tpu.memory_space<vmem>>) attributes {dimension_semantics = [#tpu.dimension_semantics<parallel>], iteration_bounds = array<i64: 2>, scalar_prefetch = 0 : i64, scratch_operands = 0 : i64, tpu.core_type = #tpu.core_type<tc>, window_params = [{transform_indices = @transform_0, window_bounds = array<i64: 32, 512>}, {pipeline_mode = #tpu.pipeline_mode<synchronous>, transform_indices = @transform_1, window_bounds = array<i64: 8, 32>}, {transform_indices = @transform_2, window_bounds = array<i64: 1, 512>}, {pipeline_mode = #tpu.pipeline_mode<synchronous>, transform_indices = @transform_3, window_bounds = array<i64: 8, 1>}, {pipeline_mode = #tpu.pipeline_mode<synchronous>, transform_indices = @transform_4, window_bounds = array<i64: 8, 1>}, {transform_indices = @transform_5, window_bounds = array<i64: 8, 512>}]} {
    %c0 = arith.constant 0 : index
    %c0_0 = arith.constant 0 : index
    %0 = vector.load %arg2[%c0, %c0_0] : memref<8x32xbf16, #tpu.memory_space<vmem>>, vector<8x32xbf16>
    %c0_1 = arith.constant 0 : index
    %c0_2 = arith.constant 0 : index
    %1 = vector.load %arg1[%c0_1, %c0_2] : memref<32x512xbf16, #tpu.memory_space<vmem>>, vector<32x512xbf16>
    %cst = arith.constant dense<0.000000e+00> : vector<8x512xf32>
    %2 = tpu.matmul %0, %1, %cst {dimension_numbers = #tpu.dot_dimension_numbers<[1], [0], [0], [1], [0, 0, 1, 1], [], []>} : vector<8x32xbf16>, vector<32x512xbf16>, vector<8x512xf32> -> vector<8x512xf32>
    %c0_3 = arith.constant 0 : index
    %c0_4 = arith.constant 0 : index
    %3 = vector.load %arg4[%c0_3, %c0_4] : memref<8x1xf32, #tpu.memory_space<vmem>>, vector<8x1xf32>
    %4 = vector.broadcast %3 : vector<8x1xf32> to vector<8x512xf32>
    %5 = arith.mulf %2, %4 : vector<8x512xf32>
    %c0_5 = arith.constant 0 : index
    %c0_6 = arith.constant 0 : index
    %6 = vector.load %arg5[%c0_5, %c0_6] : memref<8x1xf32, #tpu.memory_space<vmem>>, vector<8x1xf32>
    %7 = vector.broadcast %6 : vector<8x1xf32> to vector<8x512xf32>
    %8 = arith.addf %5, %7 : vector<8x512xf32>
    %cst_7 = arith.constant 0.000000e+00 : f32
    %9 = vector.broadcast %cst_7 : f32 to vector<8x512xf32>
    %10 = arith.cmpf ogt, %8, %9 : vector<8x512xf32>
    %cst_8 = arith.constant 3.330000e-01 : f32
    %11 = vector.broadcast %cst_8 : f32 to vector<8x512xf32>
    %12 = arith.mulf %11, %8 : vector<8x512xf32>
    %13 = arith.select %10, %8, %12 : vector<8x512xi1>, vector<8x512xf32>
    %c0_9 = arith.constant 0 : index
    %c0_10 = arith.constant 0 : index
    %14 = vector.load %arg3[%c0_9, %c0_10] : memref<1x512xf32, #tpu.memory_space<vmem>>, vector<1x512xf32>
    %15 = vector.broadcast %14 : vector<1x512xf32> to vector<8x512xf32>
    %16 = arith.mulf %13, %15 : vector<8x512xf32>
    %c0_11 = arith.constant 0 : index
    %c0_12 = arith.constant 0 : index
    %17 = vector.load %arg6[%c0_11, %c0_12] : memref<8x512xf32, #tpu.memory_space<vmem>>, vector<8x512xf32>
    tpu.vector_store %arg6[%c0_11, %c0_12], %16 {strides = array<i32>} : memref<8x512xf32, #tpu.memory_space<vmem>>, vector<8x512xf32>,
    return
  }
  func.func @transform_0(%arg0: i32) -> (i32, i32) {
    %c0_i32 = arith.constant 0 : i32
    %c0_i32_0 = arith.constant 0 : i32
    return %c0_i32, %arg0 : i32, i32
  }
  func.func @transform_1(%arg0: i32) -> (i32, i32) {
    %c0_i32 = arith.constant 0 : i32
    %c0_i32_0 = arith.constant 0 : i32
    %c0_i32_1 = arith.constant 0 : i32
    return %c0_i32, %c0_i32_0 : i32, i32
  }
  func.func @transform_2(%arg0: i32) -> (i32, i32) {
    %c0_i32 = arith.constant 0 : i32
    %c0_i32_0 = arith.constant 0 : i32
    return %c0_i32, %arg0 : i32, i32
  }
  func.func @transform_3(%arg0: i32) -> (i32, i32) {
    %c0_i32 = arith.constant 0 : i32
    %c0_i32_0 = arith.constant 0 : i32
    %c0_i32_1 = arith.constant 0 : i32
    return %c0_i32, %c0_i32_0 : i32, i32
  }
  func.func @transform_4(%arg0: i32) -> (i32, i32) {
    %c0_i32 = arith.constant 0 : i32
    %c0_i32_0 = arith.constant 0 : i32
    %c0_i32_1 = arith.constant 0 : i32
    return %c0_i32, %c0_i32_0 : i32, i32
  }
  func.func @transform_5(%arg0: i32) -> (i32, i32) {
    %c0_i32 = arith.constant 0 : i32
    %c0_i32_0 = arith.constant 0 : i32
    return %c0_i32, %arg0 : i32, i32
  }
}

</mosaic_0001>

<llo_original>
// kernel: tpu_custom_call.1
$region0: #{tpu_custom_call.1}
  #allocation0 [shape = 'u32[]', space=smem, size = 0x4, offset = 0x4, fixed_abs, tag = 'smem constant byte address 0x4 - core index']
  #allocation1 [shape = 'u32[144,128]{1,0:T(1,128)}', space=vmem, size = 0x12000, scoped, tag = 'internal scratch']
  %s0 = inlined_call_operand.hbm [shape: bf16[32,1024], index: 0, kind: input, shape index: {}]
  %s1 = inlined_call_operand.vmem [shape: bf16[8,32], index: 1, kind: input, shape index: {}]
  %s2 = inlined_call_operand.vmem [shape: f32[1,1024], index: 2, kind: input, shape index: {}]
  %s3 = inlined_call_operand.vmem [shape: f32[8,1], index: 3, kind: input, shape index: {}]
  %s4 = inlined_call_operand.vmem [shape: f32[8,1], index: 4, kind: input, shape index: {}]
  %s5 = inlined_call_operand.hbm [shape: f32[8,1024], index: 5, kind: output, shape index: {}]
  %s6 = sld [smem:[#allocation0]]
  $region57: #{tpu_custom_call.1} parent=0
    _
  %s8 = ssub.s32 1, %s6
  %s9 = scalar_select 0, %s8, %s6
  $region1: #{tpu_custom_call.1} parent=0
    #allocation2 [shape = 'u8[65536]{0}', space=vmem, size = 0x10000, scoped, tag = 'input window, operand 0']
    #allocation3 [shape = 's32[2]{0}', space=sflag, size = 0x8, scoped, tag = 'scoped memory for tpu_custom_call.1']
    #allocation4 [shape = 's32[2]{0}', space=sflag, size = 0x8, scoped, tag = 'scoped memory for tpu_custom_call.1']
    #allocation5 [shape = 'u8[32768]{0}', space=vmem, size = 0x8000, scoped, tag = 'output window, operand 0']
    %10 = vsyncpa [#allocation3], 0
    %s11 = scalar_lea.sflag [#allocation3], 1
    %12 = vsyncpa %s11, 0
    %13 = vsyncpa [#allocation4], 0
    %s14 = scalar_lea.sflag [#allocation4], 1
    %15 = vsyncpa %s14, 0
    loop: start=0, step=1, limit=4
    $region2: #{tpu_custom_call.1} parent=1 // loop_pre_header
      _
    $region3: #{tpu_custom_call.1} parent=1 // loop_header
      %s17 = sphi 0, %s21
      %p18 = scmp.ge.s32.totalorder %s17, 4
      %s27 = sphi 0, %s29
      %s30 = sphi 0, %s27
      %s31 = sphi 0, %s30
      %s47 = sphi 0, %s31
      %s51 = sphi 0, %s51
      %s53 = sphi 0, %s51
      %s54 = sphi 0, %s53
      %s68 = sphi 0, %s54
      %s74 = sphi 0, %s76
      %s77 = sphi 0, %s74
      %s78 = sphi 0, %s77
      %s94 = sphi 0, %s78
      %s98 = sphi 0, %s98
      %s100 = sphi 0, %s98
      %s101 = sphi 0, %s100
      %s115 = sphi 0, %s101
      %s119 = sphi 0, %s119
      %s121 = sphi 0, %s119
      %s122 = sphi 0, %s121
      %s136 = sphi 0, %s122
      %s142 = sphi 0, %s144
      %s145 = sphi 0, %s142
      %s146 = sphi 0, %s145
      %s162 = sphi 0, %s146
    $region4: #{tpu_custom_call.1} parent=1 // loop_header_branch
      %20 = sbr.rel (%p18) target = $region8
    $region5: #{tpu_custom_call.1} parent=1 // loop_body
      %s22 = ssub.s32 %s17, 1
      %s23 = ssub.s32 %s17, 2
      %s24 = sadd.s32 %s17, 1
      %s25 = ssub.s32 %s17, %s24
      %p26 = scmp.eq.s32.totalorder %s25, 0
      %s28 = sadd.s32 %s27, 1
      %s29 = scalar_select %p26, %s27, %s28
      %p32 = pneg %p26
      %p33 = scmp.eq.s32.totalorder %s17, 1
      %p34 = por %p32, %p33
      %p35 = scmp.ne.s32.totalorder %s27, %s30
      %p36 = scmp.eq.s32.totalorder %s17, 0
      %p37 = por %p35, %p36
      %p38 = scmp.ne.s32.totalorder %s27, %s30
      %p39 = scmp.eq.s32.totalorder %s22, 1
      %p40 = por %p38, %p39
      %p41 = scmp.ne.s32.totalorder %s30, %s31
      %p42 = scmp.eq.s32.totalorder %s22, 0
      %p43 = por %p41, %p42
      %p44 = scmp.ne.s32.totalorder %s30, %s31
      %p45 = scmp.eq.s32.totalorder %s23, 1
      %p46 = por %p44, %p45
      %p48 = scmp.ne.s32.totalorder %s31, %s47
      %p49 = scmp.eq.s32.totalorder %s23, 0
      %p50 = por %p48, %p49
      %s52 = sadd.s32 %s51, 1
      %p55 = scmp.eq.s32.totalorder %s17, 1
      %p56 = scmp.ne.s32.totalorder %s51, %s53
      %p57 = scmp.eq.s32.totalorder %s17, 0
      %p58 = por %p56, %p57
      %p59 = scmp.ne.s32.totalorder %s51, %s53
      %p60 = scmp.eq.s32.totalorder %s22, 1
      %p61 = por %p59, %p60
      %p62 = scmp.ne.s32.totalorder %s53, %s54
      %p63 = scmp.eq.s32.totalorder %s22, 0
      %p64 = por %p62, %p63
      %p65 = scmp.ne.s32.totalorder %s53, %s54
      %p66 = scmp.eq.s32.totalorder %s23, 1
      %p67 = por %p65, %p66
      %p69 = scmp.ne.s32.totalorder %s54, %s68
      %p70 = scmp.eq.s32.totalorder %s23, 0
      %p71 = por %p69, %p70
      %s72 = ssub.s32 %s17, %s24
      %p73 = scmp.eq.s32.totalorder %s72, 0
      %s75 = sadd.s32 %s74, 1
      %s76 = scalar_select %p73, %s74, %s75
      %p79 = pneg %p73
      %p80 = scmp.eq.s32.totalorder %s17, 1
      %p81 = por %p79, %p80
      %p82 = scmp.ne.s32.totalorder %s74, %s77
      %p83 = scmp.eq.s32.totalorder %s17, 0
      %p84 = por %p82, %p83
      %p85 = scmp.ne.s32.totalorder %s74, %s77
      %p86 = scmp.eq.s32.totalorder %s22, 1
      %p87 = por %p85, %p86
      %p88 = scmp.ne.s32.totalorder %s77, %s78
      %p89 = scmp.eq.s32.totalorder %s22, 0
      %p90 = por %p88, %p89
      %p91 = scmp.ne.s32.totalorder %s77, %s78
      %p92 = scmp.eq.s32.totalorder %s23, 1
      %p93 = por %p91, %p92
      %p95 = scmp.ne.s32.totalorder %s78, %s94
      %p96 = scmp.eq.s32.totalorder %s23, 0
      %p97 = por %p95, %p96
      %s99 = sadd.s32 %s98, 1
      %p102 = scmp.eq.s32.totalorder %s17, 1
      %p103 = scmp.ne.s32.totalorder %s98, %s100
      %p104 = scmp.eq.s32.totalorder %s17, 0
      %p105 = por %p103, %p104
      %p106 = scmp.ne.s32.totalorder %s98, %s100
      %p107 = scmp.eq.s32.totalorder %s22, 1
      %p108 = por %p106, %p107
      %p109 = scmp.ne.s32.totalorder %s100, %s101
      %p110 = scmp.eq.s32.totalorder %s22, 0
      %p111 = por %p109, %p110
      %p112 = scmp.ne.s32.totalorder %s100, %s101
      %p113 = scmp.eq.s32.totalorder %s23, 1
      %p114 = por %p112, %p113
      %p116 = scmp.ne.s32.totalorder %s101, %s115
      %p117 = scmp.eq.s32.totalorder %s23, 0
      %p118 = por %p116, %p117
      %s120 = sadd.s32 %s119, 1
      %p123 = scmp.eq.s32.totalorder %s17, 1
      %p124 = scmp.ne.s32.totalorder %s119, %s121
      %p125 = scmp.eq.s32.totalorder %s17, 0
      %p126 = por %p124, %p125
      %p127 = scmp.ne.s32.totalorder %s119, %s121
      %p128 = scmp.eq.s32.totalorder %s22, 1
      %p129 = por %p127, %p128
      %p130 = scmp.ne.s32.totalorder %s121, %s122
      %p131 = scmp.eq.s32.totalorder %s22, 0
      %p132 = por %p130, %p131
      %p133 = scmp.ne.s32.totalorder %s121, %s122
      %p134 = scmp.eq.s32.totalorder %s23, 1
      %p135 = por %p133, %p134
      %p137 = scmp.ne.s32.totalorder %s122, %s136
      %p138 = scmp.eq.s32.totalorder %s23, 0
      %p139 = por %p137, %p138
      %s140 = ssub.s32 %s17, %s24
      %p141 = scmp.eq.s32.totalorder %s140, 0
      %s143 = sadd.s32 %s142, 1
      %s144 = scalar_select %p141, %s142, %s143
      %p147 = pneg %p141
      %p148 = scmp.eq.s32.totalorder %s17, 1
      %p149 = por %p147, %p148
      %p150 = scmp.ne.s32.totalorder %s142, %s145
      %p151 = scmp.eq.s32.totalorder %s17, 0
      %p152 = por %p150, %p151
      %p153 = scmp.ne.s32.totalorder %s142, %s145
      %p154 = scmp.eq.s32.totalorder %s22, 1
      %p155 = por %p153, %p154
      %p156 = scmp.ne.s32.totalorder %s145, %s146
      %p157 = scmp.eq.s32.totalorder %s22, 0
      %p158 = por %p156, %p157
      %p159 = scmp.ne.s32.totalorder %s145, %s146
      %p160 = scmp.eq.s32.totalorder %s23, 1
      %p161 = por %p159, %p160
      %p163 = scmp.ne.s32.totalorder %s146, %s162
      %p164 = scmp.eq.s32.totalorder %s23, 0
      %p165 = por %p163, %p164
      %p166 = scmp.le.s32.totalorder 1, %s17
      %p167 = scmp.lt.s32.totalorder %s17, 3
      %p168 = pnand %p166, %p167
      %p169 = pneg %p168
      // Predicated region
      $region9: #{tpu_custom_call.1} parent=5 // pred_check
        _
      $region10: #{tpu_custom_call.1} parent=5 // pred_check_branch
        %171 = sbr.rel (%p168) target = $region12
      $region11: #{tpu_custom_call.1} parent=5 // pred_region
        %s172 = ssub.s32 %s17, 1
        // Predicated region
        $region13: #{tpu_custom_call.1} parent=11 // pred_check
          %p173 = pneg %p64
        $region14: #{tpu_custom_call.1} parent=11 // pred_check_branch
          %175 = sbr.rel (%p173) target = $region16
        $region15: #{tpu_custom_call.1} parent=11 // pred_region
          _
        $region16: #{tpu_custom_call.1} parent=11 // pred_fallthru
          _
        // Predicated region
        $region17: #{tpu_custom_call.1} parent=11 // pred_check
          %p176 = pneg %p111
        $region18: #{tpu_custom_call.1} parent=11 // pred_check_branch
          %178 = sbr.rel (%p176) target = $region20
        $region19: #{tpu_custom_call.1} parent=11 // pred_region
          _
        $region20: #{tpu_custom_call.1} parent=11 // pred_fallthru
          _
        // Predicated region
        $region21: #{tpu_custom_call.1} parent=11 // pred_check
          %p179 = pneg %p132
        $region22: #{tpu_custom_call.1} parent=11 // pred_check_branch
          %181 = sbr.rel (%p179) target = $region24
        $region23: #{tpu_custom_call.1} parent=11 // pred_region
          _
        $region24: #{tpu_custom_call.1} parent=11 // pred_fallthru
          _
      $region12: #{tpu_custom_call.1} parent=5 // pred_fallthru
        _
      %p182 = scmp.lt.s32.totalorder %s17, 2
      // Predicated region
      $region25: #{tpu_custom_call.1} parent=5 // pred_check
        %p183 = pneg %p182
      $region26: #{tpu_custom_call.1} parent=5 // pred_check_branch
        %185 = sbr.rel (%p183) target = $region28
      $region27: #{tpu_custom_call.1} parent=5 // pred_region
        // Predicated region
        $region29: #{tpu_custom_call.1} parent=27 // pred_check
          %p186 = pneg %p37
        $region30: #{tpu_custom_call.1} parent=27 // pred_check_branch
          %188 = sbr.rel (%p186) target = $region32
        $region31: #{tpu_custom_call.1} parent=27 // pred_region
          %s189 = sand.u32 %s27, 1
          %s190 = scalar_lea.sflag [#allocation3], %s189
          %s191 = sand.u32 %s27, 1
          %s192 = smul.addr %s191, 64
          %s193 = scalar_lea.vmem [#allocation2], %s192
          %s194 = smul.u32 4, %s17
          %s196 = ssub.s32 1024, 1024
          %197 = vsyncadd %s190, %s196
          %s198 = smul.addr %s194, 64
          %s199 = scalar_lea.hbm %s0, %s198
          %s200 = sshll.u32 %s193, 4
          %s201 = int_to_ptr.vmem [resolvable:$true] %s200
          %206 = dma.hbm_to_vmem [thread:$0]  %s199, 1024, %s201, %s190, 512, 256, 16
        $region32: #{tpu_custom_call.1} parent=27 // pred_fallthru
          _
        // Predicated region
        $region33: #{tpu_custom_call.1} parent=27 // pred_check
          %p207 = pneg %p84
        $region34: #{tpu_custom_call.1} parent=27 // pred_check_branch
          %209 = sbr.rel (%p207) target = $region36
        $region35: #{tpu_custom_call.1} parent=27 // pred_region
          %s210 = smul.u32 4, %s17
          %p211 = scmp.lt.s32.totalorder %s210, 7
          %s212 = scalar_select %p211, %s210, 7
          %s213 = scalar_lea.vmem %s2, %s212
          %s214 = smul.u32 4, %s17
        $region36: #{tpu_custom_call.1} parent=27 // pred_fallthru
          _
      $region28: #{tpu_custom_call.1} parent=5 // pred_fallthru
        _
      %p215 = scmp.le.s32.totalorder 1, %s17
      %p216 = scmp.lt.s32.totalorder %s17, 3
      %p217 = pnand %p215, %p216
      %p218 = pneg %p217
      // Predicated region
      $region37: #{tpu_custom_call.1} parent=5 // pred_check
        _
      $region38: #{tpu_custom_call.1} parent=5 // pred_check_branch
        %220 = sbr.rel (%p217) target = $region40
      $region39: #{tpu_custom_call.1} parent=5 // pred_region
        %s221 = ssub.s32 %s17, 1
        %s222 = sand.u32 %s30, 1
        %s223 = scalar_lea.sflag [#allocation3], %s222
        %s224 = sand.u32 %s30, 1
        %s225 = smul.addr %s224, 64
        %s226 = scalar_lea.vmem [#allocation2], %s225
        // Predicated region
        $region41: #{tpu_custom_call.1} parent=39 // pred_check
          %p227 = pneg %p43
        $region42: #{tpu_custom_call.1} parent=39 // pred_check_branch
          %229 = sbr.rel (%p227) target = $region44
        $region43: #{tpu_custom_call.1} parent=39 // pred_region
          %230 = dma.done %s223, 1024
        $region44: #{tpu_custom_call.1} parent=39 // pred_fallthru
          _
        %s231 = sand.u32 %s30, 1
        %s232 = scalar_lea.sflag [#allocation3], %s231
        %s233 = sand.u32 %s30, 1
        %s234 = smul.addr %s233, 64
        %s235 = scalar_lea.vmem [#allocation2], %s234
        %p236 = pneg %p43
        %p237 = pneg %p40
        %p238 = pneg %p64
        %p239 = pneg %p61
        %s240 = smul.u32 4, %s22
        %p241 = scmp.lt.s32.totalorder %s240, 7
        %s242 = scalar_select %p241, %s240, 7
        %s243 = scalar_lea.vmem %s2, %s242
        %p244 = pneg %p90
        %p245 = pneg %p87
        %p246 = pneg %p111
        %p247 = pneg %p108
        %p248 = pneg %p132
        %p249 = pneg %p129
        %p250 = pneg %p158
        %p251 = pneg %p155
        %s252 = sand.u32 %s145, 1
        %s253 = scalar_lea.sflag [#allocation4], %s252
        %s254 = sand.u32 %s145, 1
        %s255 = smul.addr %s254, 32
        %s256 = scalar_lea.vmem [#allocation5], %s255
        %s257 = smul.u32 4, %s22
        %s258 = smul.u32 4, %s22
        %p259 = scmp.lt.s32.totalorder %s258, 7
        %s260 = scalar_select %p259, %s258, 7
        %s261 = scalar_lea.vmem %s2, %s260
        %s262 = smul.u32 4, %s22
        %s263 = smul.u32 4, %s22
        %v265 = vld [vmem:[%s1] sm:$0xf]
        %v266 = vld [vmem:[%s226] sm:$0xff]
        %v267 = vld [vmem:[%s226 + $0x8] sm:$0xff]
        %v268 = vld [vmem:[%s226 + $0x10] sm:$0xff]
        %v269 = vld [vmem:[%s226 + $0x18] sm:$0xff]
        %v270 = vld [vmem:[%s226 + $0x20] sm:$0xff]
        %v271 = vld [vmem:[%s226 + $0x28] sm:$0xff]
        %v272 = vld [vmem:[%s226 + $0x30] sm:$0xff]
        %v273 = vld [vmem:[%s226 + $0x38] sm:$0xff]
        %v282 = vunpack.c.l.b16 %v266
        %v283 = vunpack.c.h.b16 %v266
        %v284 = vunpack.c.l.b16 %v267
        %v285 = vunpack.c.h.b16 %v267
        %v286 = vunpack.c.l.b16 %v268
        %v287 = vunpack.c.h.b16 %v268
        %v288 = vunpack.c.l.b16 %v269
        %v289 = vunpack.c.h.b16 %v269
        %v290 = vunpack.c.l.b16 %v270
        %v291 = vunpack.c.h.b16 %v270
        %v292 = vunpack.c.l.b16 %v271
        %v293 = vunpack.c.h.b16 %v271
        %v294 = vunpack.c.l.b16 %v272
        %v295 = vunpack.c.h.b16 %v272
        %v296 = vunpack.c.l.b16 %v273
        %v297 = vunpack.c.h.b16 %v273
        %v298 = vpack.c.b16 %v286, %v282
        %v299 = vpack.c.b16 %v287, %v283
        %v300 = vpack.c.b16 %v288, %v284
        %v301 = vpack.c.b16 %v289, %v285
        %v302 = vpack.c.b16 %v294, %v290
        %v303 = vpack.c.b16 %v295, %v291
        %v304 = vpack.c.b16 %v296, %v292
        %v305 = vpack.c.b16 %v297, %v293
        %vm314 = vcmask 261120
        %v316 = vsel %vm314, %v265, 0
        %318 = vmatprep.subr.bf16.mxu0 0
        %319 = vmatpush1.bf16.msra.mxu0 0
        %320 = vmatprep.subr.bf16.mxu0 0
        %321 = vmatpush1.bf16.msra.mxu0 0
        %322 = vmatprep.subr.bf16.mxu0 0
        %323 = vmatpush1.bf16.msra.mxu0 0
        %324 = vmatprep.subr.bf16.mxu0 0
        %325 = vmatpush1.bf16.msra.mxu0 0
        %326 = vmatprep.subr.bf16.mxu0 0
        %327 = vmatpush1.bf16.msra.mxu0 0
        %328 = vmatprep.subr.bf16.mxu0 0
        %329 = vmatpush1.bf16.msra.mxu0 0
        %330 = vmatprep.subr.bf16.mxu0 %v303
        %331 = vmatpush1.bf16.msra.mxu0 %v302
        %332 = vmatprep.subr.bf16.mxu0 %v299
        %333 = vmatpush1.bf16.msra.mxu0 %v298
        %334 = vmatprep.subr.bf16.mxu0 0
        %335 = vmatpush2.bf16.msra.mxu0 0
        %336 = vmatprep.subr.bf16.mxu0 0
        %337 = vmatpush2.bf16.msra.mxu0 0
        %338 = vmatprep.subr.bf16.mxu0 0
        %339 = vmatpush2.bf16.msra.mxu0 0
        %340 = vmatprep.subr.bf16.mxu0 0
        %341 = vmatpush2.bf16.msra.mxu0 0
        %342 = vmatprep.subr.bf16.mxu0 0
        %343 = vmatpush2.bf16.msra.mxu0 0
        %344 = vmatprep.subr.bf16.mxu0 0
        %345 = vmatpush2.bf16.msra.mxu0 0
        %346 = vmatprep.subr.bf16.mxu0 0
        %347 = vmatpush2.bf16.msra.mxu0 0
        %348 = vmatprep.subr.bf16.mxu0 0
        %349 = vmatpush2.bf16.msra.mxu0 0
        %350 = vmatprep.mubr.bf16.mxu0 0
        %351 = vmatmul.mubr.bf16.gmra.mxu0 %v316
        %v352 = vpop.f32.mrf.mxu0
        %v353 = vadd.f32 0.0, %v352
        %v354 = vpop.f32.mrf.mxu0
        %v355 = vadd.f32 0.0, %v354
        %v356 = vpop.f32.mrf.mxu0
        %v357 = vpop.f32.mrf.mxu0
        %358 = vdwg.mxu0
        %359 = vmatprep.subr.bf16.mxu0 0
        %360 = vmatpush1.bf16.msra.mxu0 0
        %361 = vmatprep.subr.bf16.mxu0 0
        %362 = vmatpush1.bf16.msra.mxu0 0
        %363 = vmatprep.subr.bf16.mxu0 0
        %364 = vmatpush1.bf16.msra.mxu0 0
        %365 = vmatprep.subr.bf16.mxu0 0
        %366 = vmatpush1.bf16.msra.mxu0 0
        %367 = vmatprep.subr.bf16.mxu0 0
        %368 = vmatpush1.bf16.msra.mxu0 0
        %369 = vmatprep.subr.bf16.mxu0 0
        %370 = vmatpush1.bf16.msra.mxu0 0
        %371 = vmatprep.subr.bf16.mxu0 %v305
        %372 = vmatpush1.bf16.msra.mxu0 %v304
        %373 = vmatprep.subr.bf16.mxu0 %v301
        %374 = vmatpush1.bf16.msra.mxu0 %v300
        %375 = vmatprep.subr.bf16.mxu0 0
        %376 = vmatpush2.bf16.msra.mxu0 0
        %377 = vmatprep.subr.bf16.mxu0 0
        %378 = vmatpush2.bf16.msra.mxu0 0
        %379 = vmatprep.subr.bf16.mxu0 0
        %380 = vmatpush2.bf16.msra.mxu0 0
        %381 = vmatprep.subr.bf16.mxu0 0
        %382 = vmatpush2.bf16.msra.mxu0 0
        %383 = vmatprep.subr.bf16.mxu0 0
        %384 = vmatpush2.bf16.msra.mxu0 0
        %385 = vmatprep.subr.bf16.mxu0 0
        %386 = vmatpush2.bf16.msra.mxu0 0
        %387 = vmatprep.subr.bf16.mxu0 0
        %388 = vmatpush2.bf16.msra.mxu0 0
        %389 = vmatprep.subr.bf16.mxu0 0
        %390 = vmatpush2.bf16.msra.mxu0 0
        %391 = vmatprep.mubr.bf16.mxu0 0
        %392 = vmatmul.mubr.bf16.gmra.mxu0 %v316
        %v393 = vpop.f32.mrf.mxu0
        %v394 = vadd.f32 0.0, %v393
        %v395 = vpop.f32.mrf.mxu0
        %v396 = vadd.f32 0.0, %v395
        %v397 = vpop.f32.mrf.mxu0
        %v398 = vpop.f32.mrf.mxu0
        %399 = vdwg.mxu0
        %v400 = vld [vmem:[%s3] sm:$0xff]
        %402 = vset.pattern.permute.xlu0 0
        %403 = vperm.xlu0 %402, %v400
        %v404 = vpop.permute.xlu0 %403
        %v406 = vmul.f32 %v353, %v404
        %v407 = vmul.f32 %v355, %v404
        %v408 = vmul.f32 %v394, %v404
        %v409 = vmul.f32 %v396, %v404
        %v410 = vld [vmem:[%s4] sm:$0xff]
        %412 = vset.pattern.permute.xlu0 0
        %413 = vperm.xlu0 %412, %v410
        %v414 = vpop.permute.xlu0 %413
        %v416 = vadd.f32 %v406, %v414
        %v417 = vadd.f32 %v407, %v414
        %v418 = vadd.f32 %v408, %v414
        %v419 = vadd.f32 %v409, %v414
        %vm420 = vcmp.gt.f32.partialorder %v416, 0.0
        %vm421 = vcmp.gt.f32.partialorder %v417, 0.0
        %vm422 = vcmp.gt.f32.partialorder %v418, 0.0
        %vm423 = vcmp.gt.f32.partialorder %v419, 0.0
        %v424 = vmul.f32 %v416, 0.333
        %v425 = vmul.f32 %v417, 0.333
        %v426 = vmul.f32 %v418, 0.333
        %v427 = vmul.f32 %v419, 0.333
        %v428 = vsel %vm420, %v416, %v424
        %v429 = vsel %vm421, %v417, %v425
        %v430 = vsel %vm422, %v418, %v426
        %v431 = vsel %vm423, %v419, %v427
        %v432 = vld [vmem:[%s261] sm:$0xf]
        %v434 = vlaneseq
        %v435 = vshrl.u32 %v434, 7
        %v436 = vsub.s32 0, %v435
        %v437 = vrot.slane %v432, %v436
        %v438 = vlaneseq
        %v439 = vshrl.u32 %v438, 7
        %v440 = vsub.s32 1, %v439
        %v441 = vrot.slane %v432, %v440
        %v442 = vlaneseq
        %v443 = vshrl.u32 %v442, 7
        %v444 = vsub.s32 2, %v443
        %v445 = vrot.slane %v432, %v444
        %v446 = vlaneseq
        %v447 = vshrl.u32 %v446, 7
        %v448 = vsub.s32 3, %v447
        %v449 = vrot.slane %v432, %v448
        %v454 = vmul.f32 %v428, %v437
        %v455 = vmul.f32 %v429, %v441
        %v456 = vmul.f32 %v430, %v445
        %v457 = vmul.f32 %v431, %v449
        %458 = vst [vmem:[%s256] sm:$0xff] %v454
        %459 = vst [vmem:[%s256 + $0x8] sm:$0xff] %v455
        %460 = vst [vmem:[%s256 + $0x10] sm:$0xff] %v456
        %461 = vst [vmem:[%s256 + $0x18] sm:$0xff] %v457
        %s462 = sand.u32 %s145, 1
        %s463 = scalar_lea.sflag [#allocation4], %s462
        %s464 = sand.u32 %s145, 1
        %s465 = smul.addr %s464, 32
        %s466 = scalar_lea.vmem [#allocation5], %s465
        // Predicated region
        $region45: #{tpu_custom_call.1} parent=39 // pred_check
          %p467 = pneg %p155
        $region46: #{tpu_custom_call.1} parent=39 // pred_check_branch
          %469 = sbr.rel (%p467) target = $region48
        $region47: #{tpu_custom_call.1} parent=39 // pred_region
          %s470 = smul.u32 4, %s22
          %s472 = ssub.s32 512, 512
          %473 = vsyncadd %s463, %s472
          %s474 = smul.addr %s470, 128
          %s475 = scalar_lea.hbm %s5, %s474
          %s477 = sshll.u32 %s466, 4
          %s478 = int_to_ptr.vmem [resolvable:$true] %s477
          %480 = dma.vmem_to_hbm [thread:$0]  %s478, 512, %s475, %s463
        $region48: #{tpu_custom_call.1} parent=39 // pred_fallthru
          _
      $region40: #{tpu_custom_call.1} parent=5 // pred_fallthru
        _
      %p481 = scmp.le.s32.totalorder 2, %s17
      // Predicated region
      $region49: #{tpu_custom_call.1} parent=5 // pred_check
        %p482 = pneg %p481
      $region50: #{tpu_custom_call.1} parent=5 // pred_check_branch
        %484 = sbr.rel (%p482) target = $region52
      $region51: #{tpu_custom_call.1} parent=5 // pred_region
        %s485 = ssub.s32 %s17, 2
        // Predicated region
        $region53: #{tpu_custom_call.1} parent=51 // pred_check
          %p486 = pneg %p161
        $region54: #{tpu_custom_call.1} parent=51 // pred_check_branch
          %488 = sbr.rel (%p486) target = $region56
        $region55: #{tpu_custom_call.1} parent=51 // pred_region
          %s489 = sand.u32 %s146, 1
          %s490 = scalar_lea.sflag [#allocation4], %s489
          %s491 = sand.u32 %s146, 1
          %s492 = smul.addr %s491, 32
          %s493 = scalar_lea.vmem [#allocation5], %s492
          %494 = dma.done %s490, 512
        $region56: #{tpu_custom_call.1} parent=51 // pred_fallthru
          _
      $region52: #{tpu_custom_call.1} parent=5 // pred_fallthru
        _
    $region6: #{tpu_custom_call.1} parent=1 // loop_footer
      %s21 = sadd.s32 1, %s17
    $region7: #{tpu_custom_call.1} parent=1 // loop_footer_branch
      %16 = sbr.rel target = $region3
    $region8: #{tpu_custom_call.1} parent=1 // loop_exit
      _
    %495 = vsyncpa [#allocation3], 1
    %s496 = scalar_lea.sflag [#allocation3], 1
    %497 = vsyncpa %s496, 1
    %498 = vsyncpa [#allocation4], 1
    %s499 = scalar_lea.sflag [#allocation4], 1
    %500 = vsyncpa %s499, 1

</llo_original>
